<compile_context>
chip_gen: v7x
topology: tpu7x:2x2x1
jax: 0.10.0
libtpu: 0.0.40
codegen_flags: <defaults>
</compile_context>

<pallas_src>
import jax
import jax.numpy as jnp
from jax.experimental import pallas as pl
from jax.experimental.pallas import tpu as pltpu

LANE = 128
TILE_ROWS = 16   # bf16 sublane packing granularity for the batch tile


def _round_up(x, m):
    return (x + m - 1) // m * m


def value_net_kernel(x_ref, w1_ref, b1_ref, w2_ref, b2_ref, w3_ref, b3_ref, o_ref):
    # fc1: (TB, C) bf16 @ (C, H1p) bf16 with f32 accumulation; f32 bias; ReLU; cast for fc2 MXU.
    h1 = jnp.dot(x_ref[...], w1_ref[...], preferred_element_type=jnp.float32) + b1_ref[...]
    h1 = jnp.maximum(h1, 0.0).astype(jnp.bfloat16)
    # fc2: bf16 MXU, f32 accumulation; result stays f32 (no bf16 rounding before fc3).
    h2 = jnp.dot(h1, w2_ref[...], preferred_element_type=jnp.float32) + b2_ref[...]
    h2 = jnp.maximum(h2, 0.0)
    # fc3: single output column -> elementwise multiply by the f32 weight row + lane-sum (XLU).
    # Produces a (TB, 1) f32 block: 4 B/row of HBM writeback, no padded slab, no third matmul.
    o_ref[...] = jnp.sum(h2 * w3_ref[...], axis=-1, keepdims=True) + b3_ref[...]


def prepare_params(params):
    """One-time prep (hoist out of the training/inference loop and reuse):
    zero-pad hidden dims to 128 lanes, cast fc1/fc2 weights to bf16, keep biases and the fc3
    weight row in f32."""
    w1, b1, w2, b2, w3, b3 = params
    C, H1 = w1.shape
    H2 = w2.shape[1]
    H1p, H2p = _round_up(H1, LANE), _round_up(H2, LANE)

    w1p = jnp.zeros((C, H1p), jnp.float32).at[:, :H1].set(w1).astype(jnp.bfloat16)
    b1p = jnp.zeros((1, H1p), jnp.float32).at[:, :H1].set(
        jnp.asarray(b1, jnp.float32).reshape(1, -1))
    w2p = jnp.zeros((H1p, H2p), jnp.float32).at[:H1, :H2].set(w2).astype(jnp.bfloat16)
    b2p = jnp.zeros((1, H2p), jnp.float32).at[:, :H2].set(
        jnp.asarray(b2, jnp.float32).reshape(1, -1))
    w3_row = jnp.zeros((1, H2p), jnp.float32).at[:, :H2].set(
        jnp.asarray(w3, jnp.float32).reshape(1, -1))
    b3p = jnp.asarray(b3, jnp.float32).reshape(1, 1)
    return w1p, b1p, w2p, b2p, w3_row, b3p


def value_network_forward(state, action, prepared_params, *, batch_tile=1024):
    """state: (B, *input_dims) f32, action: (B, action_dim) f32 -> (B, 1) f32."""
    w1, b1, w2, b2, w3_row, b3 = prepared_params
    B = state.shape[0]
    x = jnp.concatenate([state.reshape(B, -1), action.reshape(B, -1)],
                        axis=1).astype(jnp.bfloat16)
    C = x.shape[1]
    H1p, H2p = w1.shape[1], w2.shape[1]
    assert w1.shape[0] == C, (w1.shape, C)

    # Batch tile: large enough to amortize ~0.35us/step grid overhead, multiple of 16, and
    # capped so the grid keeps >= 2 "parallel" steps when possible (v7x: 2 TensorCores share
    # the parallel axis).  Even TB=1024 keeps live VMEM at a few MiB — far under budget on
    # v5e/v6e/v7x.
    TB = min(batch_tile, _round_up(B, TILE_ROWS))
    if B > TILE_ROWS:
        TB = min(TB, _round_up(pl.cdiv(B, 2), TILE_ROWS))
    Bp = _round_up(B, TB)
    if Bp != B:
        x = jnp.pad(x, ((0, Bp - B), (0, 0)))

    # Constant index_map => operand stays resident in VMEM across grid steps.
    resident = lambda shape: pl.BlockSpec(shape, lambda i: (0, 0))

    out = pl.pallas_call(
        value_net_kernel,
        out_shape=jax.ShapeDtypeStruct((Bp, 1), jnp.float32),
        grid=(Bp // TB,),
        in_specs=[
            pl.BlockSpec((TB, C), lambda i: (i, 0)),   # x tile (bf16)
            resident((C, H1p)),                        # fc1 weight (bf16)
            resident((1, H1p)),                        # fc1 bias   (f32)
            resident((H1p, H2p)),                      # fc2 weight (bf16)
            resident((1, H2p)),                        # fc2 bias   (f32)
            resident((1, H2p)),                        # fc3 weight row (f32)
            resident((1, 1)),                          # fc3 bias   (f32)
        ],
        out_specs=pl.BlockSpec((TB, 1), lambda i: (i, 0)),
        compiler_params=pltpu.CompilerParams(dimension_semantics=("parallel",)),
    )(x, w1, b1, w2, b2, w3_row, b3)

    return out[:B, :]


def init_params(key, state_dim, action_dim, fc1_dims, fc2_dims, init_w=0.003):
    """Mirrors nn.Linear defaults (uniform +-1/sqrt(fan_in)) and the fc3 uniform(-init_w, init_w)
    override.  Weights stored as (in, out) == W.T of the PyTorch layout."""
    in_dim = state_dim + action_dim
    ks = jax.random.split(key, 6)

    def lin(kw, kb, fan_in, fan_out):
        bound = 1.0 / jnp.sqrt(fan_in)
        w = jax.random.uniform(kw, (fan_in, fan_out), jnp.float32, -bound, bound)
        b = jax.random.uniform(kb, (1, fan_out), jnp.float32, -bound, bound)
        return w, b

    w1, b1 = lin(ks[0], ks[1], in_dim, fc1_dims)
    w2, b2 = lin(ks[2], ks[3], fc1_dims, fc2_dims)
    w3 = jax.random.uniform(ks[4], (fc2_dims, 1), jnp.float32, -init_w, init_w)
    b3 = jax.random.uniform(ks[5], (1, 1), jnp.float32, -init_w, init_w)
    return (w1, b1, w2, b2, w3, b3)


def reference_forward(state, action, params):
    """Pure f32 reference (PyTorch semantics)."""
    w1, b1, w2, b2, w3, b3 = params
    B = state.shape[0]
    x = jnp.concatenate([state.reshape(B, -1), action.reshape(B, -1)], axis=1)
    x = jnp.maximum(x @ w1 + b1, 0.0)
    x = jnp.maximum(x @ w2 + b2, 0.0)
    return x @ w3 + b3


def reference_forward_bf16(state, action, params):
    """Reference matching the kernel's numerics: bf16 fc1/fc2 operands with f32 accumulation,
    fc3 entirely in f32."""
    w1, b1, w2, b2, w3, b3 = params
    B = state.shape[0]
    x = jnp.concatenate([state.reshape(B, -1), action.reshape(B, -1)],
                        axis=1).astype(jnp.bfloat16)
    h1 = jnp.maximum(jnp.dot(x, w1.astype(jnp.bfloat16),
                             preferred_element_type=jnp.float32) + b1, 0.0)
    h1 = h1.astype(jnp.bfloat16)
    h2 = jnp.maximum(jnp.dot(h1, w2.astype(jnp.bfloat16),
                             preferred_element_type=jnp.float32) + b2, 0.0)
    return h2 @ w3 + b3


# TODO(synk): the conv_list (cnn_dims) branch of forward() and the optimizer/save_model/load_model
# plumbing are not implemented; only the standard DDPG MLP critic path is covered.

if __name__ == "__main__":
    key = jax.random.PRNGKey(0)
    k_state, k_action, k_params, k_state2, k_action2 = jax.random.split(key, 5)

    B = 2
    state_dim = 16      # input_dims = (16,)
    action_dim = 4      # action_dim = (4,)
    fc1_dims, fc2_dims = 32, 32   # network_args['fc_dims']

    state = jax.random.normal(k_state, (B, state_dim), jnp.float32)
    action = jax.random.normal(k_action, (B, action_dim), jnp.float32)
    params = init_params(k_params, state_dim, action_dim, fc1_dims, fc2_dims)

    # Pad / cast weights ONCE (hoisted out of the forward) and reuse across calls.
    prep = prepare_params(params)
    fwd = jax.jit(value_network_forward)

    out = jax.block_until_ready(fwd(state, action, prep))
    assert out.shape == (B, 1), out.shape

    ref_bf16 = reference_forward_bf16(state, action, params)
    ref_f32 = reference_forward(state, action, params)
    # Tight check against a numerics-matched (bf16 matmuls, f32 fc3) reference ...
    assert jnp.allclose(out, ref_bf16, atol=1e-4, rtol=1e-3), (out, ref_bf16)
    # ... and a looser sanity check against the pure f32 reference (outputs are ~1e-2 scale).
    assert jnp.allclose(out, ref_f32, atol=3e-3, rtol=0.0), (out, ref_f32)

    # Second run: odd batch that forces row padding and a multi-step "parallel" grid.
    B2 = 37
    state2 = jax.random.normal(k_state2, (B2, state_dim), jnp.float32)
    action2 = jax.random.normal(k_action2, (B2, action_dim), jnp.float32)
    out2 = jax.block_until_ready(fwd(state2, action2, prep))
    ref2 = reference_forward_bf16(state2, action2, params)
    assert out2.shape == (B2, 1), out2.shape
    assert jnp.allclose(out2, ref2, atol=1e-4, rtol=1e-3), (out2, ref2)

    print("KERNEL_OK")
</pallas_src>

<mosaic_0001>
module attributes {stable_mosaic.version = 11 : i64} {
  func.func @value_net_kernel(%arg0: i32, %arg1: memref<16x20xbf16, #tpu.memory_space<vmem>>, %arg2: memref<20x128xbf16, #tpu.memory_space<vmem>>, %arg3: memref<1x128xf32, #tpu.memory_space<vmem>>, %arg4: memref<128x128xbf16, #tpu.memory_space<vmem>>, %arg5: memref<1x128xf32, #tpu.memory_space<vmem>>, %arg6: memref<1x128xf32, #tpu.memory_space<vmem>>, %arg7: memref<1x1xf32, #tpu.memory_space<vmem>>, %arg8: memref<16x1xf32, #tpu.memory_space<vmem>>) attributes {dimension_semantics = [#tpu.dimension_semantics<parallel>], iteration_bounds = array<i64: 1>, scalar_prefetch = 0 : i64, scratch_operands = 0 : i64, tpu.core_type = #tpu.core_type<tc>, window_params = [{transform_indices = @transform_0, window_bounds = array<i64: 16, 20>}, {pipeline_mode = #tpu.pipeline_mode<synchronous>, transform_indices = @transform_1, window_bounds = array<i64: 20, 128>}, {pipeline_mode = #tpu.pipeline_mode<synchronous>, transform_indices = @transform_2, window_bounds = array<i64: 1, 128>}, {pipeline_mode = #tpu.pipeline_mode<synchronous>, transform_indices = @transform_3, window_bounds = array<i64: 128, 128>}, {pipeline_mode = #tpu.pipeline_mode<synchronous>, transform_indices = @transform_4, window_bounds = array<i64: 1, 128>}, {pipeline_mode = #tpu.pipeline_mode<synchronous>, transform_indices = @transform_5, window_bounds = array<i64: 1, 128>}, {pipeline_mode = #tpu.pipeline_mode<synchronous>, transform_indices = @transform_6, window_bounds = array<i64: 1, 1>}, {transform_indices = @transform_7, window_bounds = array<i64: 16, 1>}]} {
    %c0 = arith.constant 0 : index
    %c0_0 = arith.constant 0 : index
    %0 = vector.load %arg1[%c0, %c0_0] : memref<16x20xbf16, #tpu.memory_space<vmem>>, vector<16x20xbf16>
    %c0_1 = arith.constant 0 : index
    %c0_2 = arith.constant 0 : index
    %1 = vector.load %arg2[%c0_1, %c0_2] : memref<20x128xbf16, #tpu.memory_space<vmem>>, vector<20x128xbf16>
    %cst = arith.constant dense<0.000000e+00> : vector<16x128xf32>
    %2 = tpu.matmul %0, %1, %cst {dimension_numbers = #tpu.dot_dimension_numbers<[1], [0], [0], [1], [0, 0, 1, 1], [], []>} : vector<16x20xbf16>, vector<20x128xbf16>, vector<16x128xf32> -> vector<16x128xf32>
    %c0_3 = arith.constant 0 : index
    %c0_4 = arith.constant 0 : index
    %3 = vector.load %arg3[%c0_3, %c0_4] : memref<1x128xf32, #tpu.memory_space<vmem>>, vector<1x128xf32>
    %4 = vector.broadcast %3 : vector<1x128xf32> to vector<16x128xf32>
    %5 = arith.addf %2, %4 : vector<16x128xf32>
    %cst_5 = arith.constant 0.000000e+00 : f32
    %6 = vector.broadcast %cst_5 : f32 to vector<16x128xf32>
    %7 = arith.maximumf %5, %6 : vector<16x128xf32>
    %8 = arith.truncf %7 : vector<16x128xf32> to vector<16x128xbf16>
    %c0_6 = arith.constant 0 : index
    %c0_7 = arith.constant 0 : index
    %9 = vector.load %arg4[%c0_6, %c0_7] : memref<128x128xbf16, #tpu.memory_space<vmem>>, vector<128x128xbf16>
    %cst_8 = arith.constant dense<0.000000e+00> : vector<16x128xf32>
    %10 = tpu.matmul %8, %9, %cst_8 {dimension_numbers = #tpu.dot_dimension_numbers<[1], [0], [0], [1], [0, 0, 1, 1], [], []>} : vector<16x128xbf16>, vector<128x128xbf16>, vector<16x128xf32> -> vector<16x128xf32>
    %c0_9 = arith.constant 0 : index
    %c0_10 = arith.constant 0 : index
    %11 = vector.load %arg5[%c0_9, %c0_10] : memref<1x128xf32, #tpu.memory_space<vmem>>, vector<1x128xf32>
    %12 = vector.broadcast %11 : vector<1x128xf32> to vector<16x128xf32>
    %13 = arith.addf %10, %12 : vector<16x128xf32>
    %cst_11 = arith.constant 0.000000e+00 : f32
    %14 = vector.broadcast %cst_11 : f32 to vector<16x128xf32>
    %15 = arith.maximumf %13, %14 : vector<16x128xf32>
    %c0_12 = arith.constant 0 : index
    %c0_13 = arith.constant 0 : index
    %16 = vector.load %arg6[%c0_12, %c0_13] : memref<1x128xf32, #tpu.memory_space<vmem>>, vector<1x128xf32>
    %17 = vector.broadcast %16 : vector<1x128xf32> to vector<16x128xf32>
    %18 = arith.mulf %15, %17 : vector<16x128xf32>
    %cst_14 = arith.constant dense<0.000000e+00> : vector<16xf32>
    %19 = vector.multi_reduction <add>, %18, %cst_14 [1] : vector<16x128xf32> to vector<16xf32>
    %20 = vector.shape_cast %19 : vector<16xf32> to vector<16x1xf32>
    %c0_15 = arith.constant 0 : index
    %c0_16 = arith.constant 0 : index
    %21 = vector.load %arg7[%c0_15, %c0_16] : memref<1x1xf32, #tpu.memory_space<vmem>>, vector<1x1xf32>
    %22 = vector.broadcast %21 : vector<1x1xf32> to vector<16x1xf32>
    %23 = arith.addf %20, %22 : vector<16x1xf32>
    %c0_17 = arith.constant 0 : index
    %c0_18 = arith.constant 0 : index
    %24 = vector.load %arg8[%c0_17, %c0_18] : memref<16x1xf32, #tpu.memory_space<vmem>>, vector<16x1xf32>
    tpu.vector_store %arg8[%c0_17, %c0_18], %23 {strides = array<i32>} : memref<16x1xf32, #tpu.memory_space<vmem>>, vector<16x1xf32>,
    return
  }
  func.func @transform_0(%arg0: i32) -> (i32, i32) {
    %c0_i32 = arith.constant 0 : i32
    %c0_i32_0 = arith.constant 0 : i32
    return %arg0, %c0_i32 : i32, i32
  }
  func.func @transform_1(%arg0: i32) -> (i32, i32) {
    %c0_i32 = arith.constant 0 : i32
    %c0_i32_0 = arith.constant 0 : i32
    %c0_i32_1 = arith.constant 0 : i32
    return %c0_i32, %c0_i32_0 : i32, i32
  }
  func.func @transform_2(%arg0: i32) -> (i32, i32) {
    %c0_i32 = arith.constant 0 : i32
    %c0_i32_0 = arith.constant 0 : i32
    %c0_i32_1 = arith.constant 0 : i32
    return %c0_i32, %c0_i32_0 : i32, i32
  }
  func.func @transform_3(%arg0: i32) -> (i32, i32) {
    %c0_i32 = arith.constant 0 : i32
    %c0_i32_0 = arith.constant 0 : i32
    %c0_i32_1 = arith.constant 0 : i32
    return %c0_i32, %c0_i32_0 : i32, i32
  }
  func.func @transform_4(%arg0: i32) -> (i32, i32) {
    %c0_i32 = arith.constant 0 : i32
    %c0_i32_0 = arith.constant 0 : i32
    %c0_i32_1 = arith.constant 0 : i32
    return %c0_i32, %c0_i32_0 : i32, i32
  }
  func.func @transform_5(%arg0: i32) -> (i32, i32) {
    %c0_i32 = arith.constant 0 : i32
    %c0_i32_0 = arith.constant 0 : i32
    %c0_i32_1 = arith.constant 0 : i32
    return %c0_i32, %c0_i32_0 : i32, i32
  }
  func.func @transform_6(%arg0: i32) -> (i32, i32) {
    %c0_i32 = arith.constant 0 : i32
    %c0_i32_0 = arith.constant 0 : i32
    %c0_i32_1 = arith.constant 0 : i32
    return %c0_i32, %c0_i32_0 : i32, i32
  }
  func.func @transform_7(%arg0: i32) -> (i32, i32) {
    %c0_i32 = arith.constant 0 : i32
    %c0_i32_0 = arith.constant 0 : i32
    return %arg0, %c0_i32 : i32, i32
  }
}

</mosaic_0001>

<llo_original>
// kernel: value_network_forward.1
$region0: #{value_network_forward.1}
  #allocation0 [shape = 'u32[]', space=smem, size = 0x4, offset = 0x4, fixed_abs, tag = 'smem constant byte address 0x4 - core index']
  #allocation1 [shape = 'u32[144,128]{1,0:T(1,128)}', space=vmem, size = 0x12000, scoped, tag = 'internal scratch']
  #allocation2 [shape = 'f32[1,1]{1,0:T(1,128)S(1)}', space=vmem, size = 0x200, scoped, tag = 'scoped memory for value_network_forward.1']
  %s0 = inlined_call_operand.vmem [shape: bf16[16,20], index: 0, kind: input, shape index: {}]
  %s1 = inlined_call_operand.vmem [shape: bf16[20,128], index: 1, kind: input, shape index: {}]
  %s2 = inlined_call_operand.vmem [shape: f32[1,128], index: 2, kind: input, shape index: {}]
  %s3 = inlined_call_operand.hbm [shape: bf16[128,128], index: 3, kind: input, shape index: {}]
  %s4 = inlined_call_operand.vmem [shape: f32[1,128], index: 4, kind: input, shape index: {}]
  %s5 = inlined_call_operand.vmem [shape: f32[1,128], index: 5, kind: input, shape index: {}]
  %s6 = inlined_call_operand.<no memory space> [shape: f32[1,1], index: 6, kind: input, shape index: {}]
  %s7 = inlined_call_operand.vmem [shape: f32[16,1], index: 7, kind: output, shape index: {}]
  %s8 = sld [smem:[#allocation0]]
  $region42: #{value_network_forward.1} parent=0
    _
  %s10 = ssub.s32 1, %s8
  %s11 = scalar_select 0, %s10, %s8
  %v12 = vstv %s6
  %13 = vst [vmem:[#allocation2] sm:$0x1] %v12
  $region1: #{value_network_forward.1} parent=0
    #allocation3 [shape = 'u8[32768]{0}', space=vmem, size = 0x8000, scoped, tag = 'input window, operand 3, single buffered']
    #allocation4 [shape = 's32[1]{0}', space=sflag, size = 0x4, scoped, tag = 'scoped memory for value_network_forward.1']
    %14 = vsyncpa [#allocation4], 0
    // Predicated region
    $region2: #{value_network_forward.1} parent=1 // pred_check
      _
    $region3: #{value_network_forward.1} parent=1 // pred_check_branch
      %16 = sbr.rel (0) target = $region5
    $region4: #{value_network_forward.1} parent=1 // pred_region
      _
    $region5: #{value_network_forward.1} parent=1 // pred_fallthru
      _
    // Predicated region
    $region6: #{value_network_forward.1} parent=1 // pred_check
      _
    $region7: #{value_network_forward.1} parent=1 // pred_check_branch
      %18 = sbr.rel (0) target = $region9
    $region8: #{value_network_forward.1} parent=1 // pred_region
      _
    $region9: #{value_network_forward.1} parent=1 // pred_fallthru
      _
    // Predicated region
    $region10: #{value_network_forward.1} parent=1 // pred_check
      _
    $region11: #{value_network_forward.1} parent=1 // pred_check_branch
      %20 = sbr.rel (0) target = $region13
    $region12: #{value_network_forward.1} parent=1 // pred_region
      _
    $region13: #{value_network_forward.1} parent=1 // pred_fallthru
      _
    // Predicated region
    $region14: #{value_network_forward.1} parent=1 // pred_check
      _
    $region15: #{value_network_forward.1} parent=1 // pred_check_branch
      %22 = sbr.rel (0) target = $region17
    $region16: #{value_network_forward.1} parent=1 // pred_region
      %s24 = ssub.s32 1024, 1024
      %25 = vsyncadd [#allocation4], %s24
      %s26 = sshll.u32 [#allocation3], 4
      %s27 = int_to_ptr.vmem [resolvable:$true] %s26
      %32 = dma.hbm_to_vmem [thread:$0]  %s3, 1024, %s27, [#allocation4], 64, 64, 4
    $region17: #{value_network_forward.1} parent=1 // pred_fallthru
      _
    // Predicated region
    $region18: #{value_network_forward.1} parent=1 // pred_check
      _
    $region19: #{value_network_forward.1} parent=1 // pred_check_branch
      %34 = sbr.rel (0) target = $region21
    $region20: #{value_network_forward.1} parent=1 // pred_region
      _
    $region21: #{value_network_forward.1} parent=1 // pred_fallthru
      _
    // Predicated region
    $region22: #{value_network_forward.1} parent=1 // pred_check
      _
    $region23: #{value_network_forward.1} parent=1 // pred_check_branch
      %36 = sbr.rel (0) target = $region25
    $region24: #{value_network_forward.1} parent=1 // pred_region
      _
    $region25: #{value_network_forward.1} parent=1 // pred_fallthru
      _
    // Predicated region
    $region26: #{value_network_forward.1} parent=1 // pred_check
      _
    $region27: #{value_network_forward.1} parent=1 // pred_check_branch
      %38 = sbr.rel (0) target = $region29
    $region28: #{value_network_forward.1} parent=1 // pred_region
      _
    $region29: #{value_network_forward.1} parent=1 // pred_fallthru
      _
    // Predicated region
    $region30: #{value_network_forward.1} parent=1 // pred_check
      _
    $region31: #{value_network_forward.1} parent=1 // pred_check_branch
      %40 = sbr.rel (0) target = $region33
    $region32: #{value_network_forward.1} parent=1 // pred_region
      %41 = dma.done [#allocation4], 1024
    $region33: #{value_network_forward.1} parent=1 // pred_fallthru
      _
    %v43 = vld [vmem:[%s0] sm:$0xf]
    %v44 = vld [vmem:[%s0 + $0x4] sm:$0xf]
    %v45 = vld [vmem:[%s1] sm:$0xf]
    %v46 = vld [vmem:[%s1 + $0x4] sm:$0xf]
    %v47 = vld [vmem:[%s1 + $0x8] sm:$0x3]
    %v48 = vld [vmem:[%s2] sm:$0x1]
    %v50 = vlaneseq
    %v51 = vshrl.u32 %v50, 7
    %v52 = vsub.s32 0, %v51
    %v53 = vrot.slane %v48, %v52
    %v57 = vunpack.c.l.b16 %v43
    %v58 = vunpack.c.l.b16 %v44
    %v59 = vpack.c.b16 %v58, %v57
    %v63 = vunpack.c.l.b16 %v45
    %v64 = vunpack.c.l.b16 %v46
    %v65 = vunpack.c.l.b16 %v47
    %v66 = vpack.c.b16 %v64, %v63
    %v67 = vpack.c.b16 %v65, %v65
    %vm69 = vcmask 162816
    %v71 = vsel %vm69, %v59, 0
    %vm73 = vcmask 1041408
    %v75 = vsel %vm73, %v67, 0
    %77 = vmatprep.subr.bf16.mxu0 0
    %78 = vmatpush1.bf16.msra.mxu0 %v66
    %79 = vmatprep.subr.bf16.mxu0 0
    %80 = vmatpush1.bf16.msra.mxu0 %v75
    %81 = vmatprep.subr.bf16.mxu0 0
    %82 = vmatpush1.bf16.msra.mxu0 0
    %83 = vmatprep.subr.bf16.mxu0 0
    %84 = vmatpush1.bf16.msra.mxu0 0
    %85 = vmatprep.subr.bf16.mxu0 0
    %86 = vmatpush1.bf16.msra.mxu0 0
    %87 = vmatprep.subr.bf16.mxu0 0
    %88 = vmatpush1.bf16.msra.mxu0 0
    %89 = vmatprep.subr.bf16.mxu0 0
    %90 = vmatpush1.bf16.msra.mxu0 0
    %91 = vmatprep.subr.bf16.mxu0 0
    %92 = vmatpush1.bf16.msra.mxu0 0
    %93 = vmatprep.subr.bf16.mxu0 0
    %94 = vmatpush1.bf16.msra.mxu0 0
    %95 = vmatprep.subr.bf16.mxu0 0
    %96 = vmatpush1.bf16.msra.mxu0 0
    %97 = vmatprep.subr.bf16.mxu0 0
    %98 = vmatpush1.bf16.msra.mxu0 0
    %99 = vmatprep.subr.bf16.mxu0 0
    %100 = vmatpush1.bf16.msra.mxu0 0
    %101 = vmatprep.subr.bf16.mxu0 0
    %102 = vmatpush1.bf16.msra.mxu0 0
    %103 = vmatprep.subr.bf16.mxu0 0
    %104 = vmatpush1.bf16.msra.mxu0 0
    %105 = vmatprep.subr.bf16.mxu0 0
    %106 = vmatpush1.bf16.msra.mxu0 0
    %107 = vmatprep.subr.bf16.mxu0 0
    %108 = vmatpush1.bf16.msra.mxu0 0
    %109 = vmatprep.mubr.bf16.mxu0 0
    %110 = vmatmul.mubr.bf16.gmra.mrb[0].mxu0 %v71
    %v111 = vpop.f32.mrb[0].mxu0
    %v112 = vadd.f32 %v53, %v111
    %v113 = vpop.f32.mrb[0].mxu0
    %v114 = vpop.f32.mrb[0].mxu0
    %v115 = vadd.f32 %v53, %v114
    %v116 = vpop.f32.mrb[0].mxu0
    %117 = vdwg.mxu0
    %v118 = vmax.f32 %v112, 0.0
    %v119 = vmax.f32 %v115, 0.0
    %v120 = vpack.c.bf16 %v119, %v118
    %v121 = vld [vmem:[#allocation3] sm:$0xf]
    %v122 = vld [vmem:[#allocation3 + $0x4] sm:$0xf]
    %v123 = vld [vmem:[#allocation3 + $0x8] sm:$0xf]
    %v124 = vld [vmem:[#allocation3 + $0xc] sm:$0xf]
    %v125 = vld [vmem:[#allocation3 + $0x10] sm:$0xf]
    %v126 = vld [vmem:[#allocation3 + $0x14] sm:$0xf]
    %v127 = vld [vmem:[#allocation3 + $0x18] sm:$0xf]
    %v128 = vld [vmem:[#allocation3 + $0x1c] sm:$0xf]
    %v129 = vld [vmem:[#allocation3 + $0x20] sm:$0xf]
    %v130 = vld [vmem:[#allocation3 + $0x24] sm:$0xf]
    %v131 = vld [vmem:[#allocation3 + $0x28] sm:$0xf]
    %v132 = vld [vmem:[#allocation3 + $0x2c] sm:$0xf]
    %v133 = vld [vmem:[#allocation3 + $0x30] sm:$0xf]
    %v134 = vld [vmem:[#allocation3 + $0x34] sm:$0xf]
    %v135 = vld [vmem:[#allocation3 + $0x38] sm:$0xf]
    %v136 = vld [vmem:[#allocation3 + $0x3c] sm:$0xf]
    %v137 = vld [vmem:[%s4] sm:$0x1]
    %v139 = vlaneseq
    %v140 = vshrl.u32 %v139, 7
    %v141 = vsub.s32 0, %v140
    %v142 = vrot.slane %v137, %v141
    %v160 = vunpack.c.l.b16 %v121
    %v161 = vunpack.c.l.b16 %v122
    %v162 = vunpack.c.l.b16 %v123
    %v163 = vunpack.c.l.b16 %v124
    %v164 = vunpack.c.l.b16 %v125
    %v165 = vunpack.c.l.b16 %v126
    %v166 = vunpack.c.l.b16 %v127
    %v167 = vunpack.c.l.b16 %v128
    %v168 = vunpack.c.l.b16 %v129
    %v169 = vunpack.c.l.b16 %v130
    %v170 = vunpack.c.l.b16 %v131
    %v171 = vunpack.c.l.b16 %v132
    %v172 = vunpack.c.l.b16 %v133
    %v173 = vunpack.c.l.b16 %v134
    %v174 = vunpack.c.l.b16 %v135
    %v175 = vunpack.c.l.b16 %v136
    %v176 = vpack.c.b16 %v161, %v160
    %v177 = vpack.c.b16 %v163, %v162
    %v178 = vpack.c.b16 %v165, %v164
    %v179 = vpack.c.b16 %v167, %v166
    %v180 = vpack.c.b16 %v169, %v168
    %v181 = vpack.c.b16 %v171, %v170
    %v182 = vpack.c.b16 %v173, %v172
    %v183 = vpack.c.b16 %v175, %v174
    %192 = vmatprep.subr.bf16.mxu0 0
    %193 = vmatpush1.bf16.msra.mxu0 %v176
    %194 = vmatprep.subr.bf16.mxu0 0
    %195 = vmatpush1.bf16.msra.mxu0 %v177
    %196 = vmatprep.subr.bf16.mxu0 0
    %197 = vmatpush1.bf16.msra.mxu0 %v178
    %198 = vmatprep.subr.bf16.mxu0 0
    %199 = vmatpush1.bf16.msra.mxu0 %v179
    %200 = vmatprep.subr.bf16.mxu0 0
    %201 = vmatpush1.bf16.msra.mxu0 %v180
    %202 = vmatprep.subr.bf16.mxu0 0
    %203 = vmatpush1.bf16.msra.mxu0 %v181
    %204 = vmatprep.subr.bf16.mxu0 0
    %205 = vmatpush1.bf16.msra.mxu0 %v182
    %206 = vmatprep.subr.bf16.mxu0 0
    %207 = vmatpush1.bf16.msra.mxu0 %v183
    %208 = vmatprep.subr.bf16.mxu0 0
    %209 = vmatpush1.bf16.msra.mxu0 0
    %210 = vmatprep.subr.bf16.mxu0 0
    %211 = vmatpush1.bf16.msra.mxu0 0
    %212 = vmatprep.subr.bf16.mxu0 0
    %213 = vmatpush1.bf16.msra.mxu0 0
    %214 = vmatprep.subr.bf16.mxu0 0
    %215 = vmatpush1.bf16.msra.mxu0 0
    %216 = vmatprep.subr.bf16.mxu0 0
    %217 = vmatpush1.bf16.msra.mxu0 0
    %218 = vmatprep.subr.bf16.mxu0 0
    %219 = vmatpush1.bf16.msra.mxu0 0
    %220 = vmatprep.subr.bf16.mxu0 0
    %221 = vmatpush1.bf16.msra.mxu0 0
    %222 = vmatprep.subr.bf16.mxu0 0
    %223 = vmatpush1.bf16.msra.mxu0 0
    %224 = vmatprep.mubr.bf16.mxu0 0
    %225 = vmatmul.mubr.bf16.gmra.mrb[0].mxu0 %v120
    %v226 = vpop.f32.mrb[0].mxu0
    %v227 = vadd.f32 %v142, %v226
    %v228 = vpop.f32.mrb[0].mxu0
    %v229 = vpop.f32.mrb[0].mxu0
    %v230 = vadd.f32 %v142, %v229
    %v231 = vpop.f32.mrb[0].mxu0
    %232 = vdwg.mxu0
    %v233 = vmax.f32 %v227, 0.0
    %v234 = vmax.f32 %v230, 0.0
    %v235 = vld [vmem:[%s5] sm:$0x1]
    %v237 = vlaneseq
    %v238 = vshrl.u32 %v237, 7
    %v239 = vsub.s32 0, %v238
    %v240 = vrot.slane %v235, %v239
    %v242 = vmul.f32 %v233, %v240
    %v243 = vmul.f32 %v234, %v240
    %244 = vadd.xlane.f32.xlu0 %v242
    %v245 = vpop.xlane.xlu0 %244
    %246 = vadd.xlane.f32.xlu0 %v243
    %v247 = vpop.xlane.xlu0 %246
    %v248 = vld [vmem:[#allocation2] sm:$0x1]
    %v250 = vlaneseq
    %v251 = vshrl.u32 %v250, 7
    %v252 = vsub.s32 0, %v251
    %v253 = vrot.slane %v248, %v252
    %v255 = vadd.f32 %v245, %v253
    %v256 = vadd.f32 %v247, %v253
    %vm257 = vcmask 7168
    %258 = vst.msk [vmem:[%s7] sm:$0xff] %vm257, %v255
    %259 = vst.msk [vmem:[%s7 + $0x8] sm:$0xff] %vm257, %v256
    // Predicated region
    $region34: #{value_network_forward.1} parent=1 // pred_check
      _
    $region35: #{value_network_forward.1} parent=1 // pred_check_branch
      %261 = sbr.rel (0) target = $region37
    $region36: #{value_network_forward.1} parent=1 // pred_region
      _
    $region37: #{value_network_forward.1} parent=1 // pred_fallthru
      _
    // Predicated region
    $region38: #{value_network_forward.1} parent=1 // pred_check
      _
    $region39: #{value_network_forward.1} parent=1 // pred_check_branch
      %263 = sbr.rel (0) target = $region41
    $region40: #{value_network_forward.1} parent=1 // pred_region
      _
    $region41: #{value_network_forward.1} parent=1 // pred_fallthru
      _
    %264 = vsyncpa [#allocation4], 1

</llo_original>
